<compile_context>
chip_gen: v7x
topology: tpu7x:2x2x1
jax: 0.10.0
libtpu: 0.0.40
codegen_flags: <defaults>
</compile_context>

<pallas_src>
import functools

import jax
import jax.numpy as jnp
from jax import lax
from jax.experimental import pallas as pl
from jax.experimental.pallas import tpu as pltpu

DH = 15          # number of RBF units
LANES = 128      # TPU lane width
CHUNK_ROWS = 64  # inner strip-mine chunk (64x128 f32 = 8 vregs per value)


def _round_up(a, b):
    return ((a + b - 1) // b) * b


def rbf_kernel(t0_ref, t1_ref, ws_ref, x_ref, o_ref, *, chunk_rows,
               use_bf16_exp):
    # t0_ref, t1_ref, ws_ref : SMEM f32[DH]  (theta[:,0]/sqrt2, theta[:,1]/sqrt2, w/DH)
    # x_ref, o_ref           : VMEM f32[row_tile, 128] (lane-dense batch tile)
    n_chunks = x_ref.shape[0] // chunk_rows

    def chunk_body(c, carry):
        r0 = pl.multiple_of(c * chunk_rows, chunk_rows)
        x = x_ref[pl.ds(r0, chunk_rows), :]            # <= 16 vregs live

        def unit_body(j, acc):
            h = x * t0_ref[j] + t1_ref[j]              # VPU broadcast FMA
            e = -(h * h)                               # -0.5 already folded in
            if use_bf16_exp:                           # opt-in v6e/v7x knob
                e = e.astype(jnp.bfloat16)
            p = jnp.exp(e).astype(jnp.float32)         # EUP (binding slot)
            return acc + ws_ref[j] * p

        acc = lax.fori_loop(0, DH, unit_body, jnp.zeros_like(x), unroll=True)
        o_ref[pl.ds(r0, chunk_rows), :] = acc          # unmasked 128-lane vst
        return carry

    lax.fori_loop(0, n_chunks, chunk_body, 0)


def rbf_reference(x, theta, w):
    xa = jnp.concatenate([x, jnp.ones_like(x)], axis=-1)
    h = xa @ theta.T
    h = jnp.exp(-(h ** 2) / 2.0)
    return (h @ w.T) / DH


def rbf_forward(x, theta, w, *, max_row_tile=2048, min_pallas_batch=1024,
                use_bf16_exp=False):
    """x: [B, 1] f32, theta: [DH, 2] f32, w: [1, DH] f32 -> [B, 1] f32."""
    B = x.shape[0]

    # Tiny batches: dispatch + layout plumbing dominate; let XLA fuse it.
    if B < min_pallas_batch:
        return rbf_reference(x.astype(jnp.float32), theta, w)

    # ----- lane-dense batch layout: [B,1] -> [rows_padded, 128] --------------
    rows = -(-B // LANES)                               # ceil(B / 128)
    tile_align = CHUNK_ROWS if rows >= CHUNK_ROWS else 8
    # Target >= 4 grid steps (v7x megacore sharding + pipeline), biggest tiles
    # otherwise (per-step overhead ~0.35us); keep default double-buffering.
    row_tile = min(max_row_tile,
                   _round_up(max(-(-rows // 4), 1), tile_align))
    rows_padded = _round_up(rows, row_tile)
    chunk_rows = min(row_tile, CHUNK_ROWS)
    total = rows_padded * LANES

    x_f32 = x.astype(jnp.float32)
    if total == B:
        x2d = x_f32.reshape(rows_padded, LANES)         # zero-copy layout
        padded = False
    else:
        x2d = jnp.pad(jnp.ravel(x_f32), (0, total - B)).reshape(
            rows_padded, LANES)
        padded = True

    # ----- scalars for SMEM: fold -0.5 into theta, 1/DH into w ---------------
    inv_sqrt2 = 0.7071067811865476
    t0 = (theta[:, 0] * inv_sqrt2).astype(jnp.float32)
    t1 = (theta[:, 1] * inv_sqrt2).astype(jnp.float32)
    ws = (w.reshape(-1) / DH).astype(jnp.float32)

    grid = (rows_padded // row_tile,)
    n_elems = rows_padded * LANES
    cost = pl.CostEstimate(
        flops=5 * DH * n_elems,
        transcendentals=DH * n_elems,
        bytes_accessed=2 * 4 * n_elems,
    )

    kernel = functools.partial(rbf_kernel, chunk_rows=chunk_rows,
                               use_bf16_exp=use_bf16_exp)

    y2d = pl.pallas_call(
        kernel,
        out_shape=jax.ShapeDtypeStruct((rows_padded, LANES), jnp.float32),
        grid=grid,
        in_specs=[
            pl.BlockSpec(memory_space=pltpu.MemorySpace.SMEM),   # theta[:,0]/sqrt2
            pl.BlockSpec(memory_space=pltpu.MemorySpace.SMEM),   # theta[:,1]/sqrt2
            pl.BlockSpec(memory_space=pltpu.MemorySpace.SMEM),   # w / DH
            pl.BlockSpec((row_tile, LANES), lambda i: (i, 0)),   # x tile
        ],
        out_specs=pl.BlockSpec((row_tile, LANES), lambda i: (i, 0)),
        compiler_params=pltpu.CompilerParams(
            dimension_semantics=("parallel",)),
        cost_estimate=cost,
    )(t0, t1, ws, x2d)

    if padded:
        return y2d.reshape(-1)[:B].reshape(B, 1)
    return y2d.reshape(B, 1)


if __name__ == "__main__":
    key = jax.random.PRNGKey(0)
    k_theta, k_w, k_x, k_x2, k_x3 = jax.random.split(key, 5)

    # Deterministic parameters, matching nn.Parameter(randn(...) * 3) shapes.
    theta = jax.random.normal(k_theta, (DH, 2), dtype=jnp.float32) * 3.0
    w = jax.random.normal(k_w, (1, DH), dtype=jnp.float32) * 3.0

    # 1) tiny batch, pallas path forced (exercises padding + tail slice)
    B = 8
    x = jax.random.normal(k_x, (B, 1), dtype=jnp.float32)
    y = jax.block_until_ready(rbf_forward(x, theta, w, min_pallas_batch=0))
    y_ref = rbf_reference(x, theta, w)
    assert y.shape == (B, 1)
    assert jnp.allclose(y, y_ref, atol=1e-5, rtol=1e-5), (y, y_ref)

    # 2) unaligned batch, pallas path forced
    B2 = 300
    x2 = jax.random.normal(k_x2, (B2, 1), dtype=jnp.float32)
    y2 = jax.block_until_ready(rbf_forward(x2, theta, w, min_pallas_batch=0))
    y2_ref = rbf_reference(x2, theta, w)
    assert y2.shape == (B2, 1)
    assert jnp.allclose(y2, y2_ref, atol=1e-5, rtol=1e-5)

    # 3) aligned batch (default pallas path): zero-copy layout, grid > 1 step
    B3 = 2048
    x3 = jax.random.normal(k_x3, (B3, 1), dtype=jnp.float32)
    y3 = jax.block_until_ready(rbf_forward(x3, theta, w))
    y3_ref = rbf_reference(x3, theta, w)
    assert y3.shape == (B3, 1)
    assert jnp.allclose(y3, y3_ref, atol=1e-5, rtol=1e-5)

    # 4) tiny-batch jnp fallback path
    y_fb = jax.block_until_ready(rbf_forward(x, theta, w))
    assert jnp.allclose(y_fb, y_ref, atol=1e-6, rtol=1e-6)

    # 5) optional bf16-exp knob (v6e/v7x): correctness smoke test, loose tol
    y3_bf = jax.block_until_ready(rbf_forward(x3, theta, w, use_bf16_exp=True))
    assert jnp.allclose(y3_bf, y3_ref, atol=1e-1, rtol=5e-2)

    print("KERNEL_OK")
</pallas_src>

<mosaic_0001>
module attributes {stable_mosaic.version = 11 : i64} {
  func.func @rbf_kernel(%arg0: i32, %arg1: memref<15xf32, #tpu.memory_space<smem>>, %arg2: memref<15xf32, #tpu.memory_space<smem>>, %arg3: memref<15xf32, #tpu.memory_space<smem>>, %arg4: memref<8x128xf32, #tpu.memory_space<vmem>>, %arg5: memref<8x128xf32, #tpu.memory_space<vmem>>) attributes {dimension_semantics = [#tpu.dimension_semantics<parallel>], iteration_bounds = array<i64: 1>, scalar_prefetch = 0 : i64, scratch_operands = 0 : i64, tpu.core_type = #tpu.core_type<tc>, window_params = [{transform_indices = @transform_0, window_bounds = array<i64: 15>}, {transform_indices = @transform_1, window_bounds = array<i64: 15>}, {transform_indices = @transform_2, window_bounds = array<i64: 15>}, {transform_indices = @transform_3, window_bounds = array<i64: 8, 128>}, {transform_indices = @transform_4, window_bounds = array<i64: 8, 128>}]} {
    %c0_i32 = arith.constant 0 : i32
    %c8_i32 = arith.constant 8 : i32
    %0 = arith.muli %c0_i32, %c8_i32 : i32
    %1 = tpu.assume_multiple %0, 8 : i32
    %2 = arith.index_cast %1 : i32 to index
    %c0 = arith.constant 0 : index
    %3 = vector.load %arg4[%2, %c0] : memref<8x128xf32, #tpu.memory_space<vmem>>, vector<8x128xf32>
    %cst = arith.constant 0.000000e+00 : f32
    %4 = vector.broadcast %cst : f32 to vector<8x128xf32>
    %c0_i32_0 = arith.constant 0 : i32
    %5 = arith.index_cast %c0_i32_0 : i32 to index
    %6 = memref.load %arg1[%5] : memref<15xf32, #tpu.memory_space<smem>>
    %7 = vector.broadcast %6 : f32 to vector<8x128xf32>
    %8 = arith.mulf %3, %7 : vector<8x128xf32>
    %9 = arith.index_cast %c0_i32_0 : i32 to index
    %10 = memref.load %arg2[%9] : memref<15xf32, #tpu.memory_space<smem>>
    %11 = vector.broadcast %10 : f32 to vector<8x128xf32>
    %12 = arith.addf %8, %11 : vector<8x128xf32>
    %13 = arith.mulf %12, %12 : vector<8x128xf32>
    %cst_1 = arith.constant 0.000000e+00 : f32
    %14 = vector.broadcast %cst_1 : f32 to vector<8x128xf32>
    %15 = arith.subf %14, %13 : vector<8x128xf32>
    %16 = math.exp %15 : vector<8x128xf32>
    %17 = arith.index_cast %c0_i32_0 : i32 to index
    %18 = memref.load %arg3[%17] : memref<15xf32, #tpu.memory_space<smem>>
    %19 = vector.broadcast %18 : f32 to vector<8x128xf32>
    %20 = arith.mulf %19, %16 : vector<8x128xf32>
    %21 = arith.addf %4, %20 : vector<8x128xf32>
    %c1_i32 = arith.constant 1 : i32
    %22 = arith.index_cast %c1_i32 : i32 to index
    %23 = memref.load %arg1[%22] : memref<15xf32, #tpu.memory_space<smem>>
    %24 = vector.broadcast %23 : f32 to vector<8x128xf32>
    %25 = arith.mulf %3, %24 : vector<8x128xf32>
    %26 = arith.index_cast %c1_i32 : i32 to index
    %27 = memref.load %arg2[%26] : memref<15xf32, #tpu.memory_space<smem>>
    %28 = vector.broadcast %27 : f32 to vector<8x128xf32>
    %29 = arith.addf %25, %28 : vector<8x128xf32>
    %30 = arith.mulf %29, %29 : vector<8x128xf32>
    %cst_2 = arith.constant 0.000000e+00 : f32
    %31 = vector.broadcast %cst_2 : f32 to vector<8x128xf32>
    %32 = arith.subf %31, %30 : vector<8x128xf32>
    %33 = math.exp %32 : vector<8x128xf32>
    %34 = arith.index_cast %c1_i32 : i32 to index
    %35 = memref.load %arg3[%34] : memref<15xf32, #tpu.memory_space<smem>>
    %36 = vector.broadcast %35 : f32 to vector<8x128xf32>
    %37 = arith.mulf %36, %33 : vector<8x128xf32>
    %38 = arith.addf %21, %37 : vector<8x128xf32>
    %c2_i32 = arith.constant 2 : i32
    %39 = arith.index_cast %c2_i32 : i32 to index
    %40 = memref.load %arg1[%39] : memref<15xf32, #tpu.memory_space<smem>>
    %41 = vector.broadcast %40 : f32 to vector<8x128xf32>
    %42 = arith.mulf %3, %41 : vector<8x128xf32>
    %43 = arith.index_cast %c2_i32 : i32 to index
    %44 = memref.load %arg2[%43] : memref<15xf32, #tpu.memory_space<smem>>
    %45 = vector.broadcast %44 : f32 to vector<8x128xf32>
    %46 = arith.addf %42, %45 : vector<8x128xf32>
    %47 = arith.mulf %46, %46 : vector<8x128xf32>
    %cst_3 = arith.constant 0.000000e+00 : f32
    %48 = vector.broadcast %cst_3 : f32 to vector<8x128xf32>
    %49 = arith.subf %48, %47 : vector<8x128xf32>
    %50 = math.exp %49 : vector<8x128xf32>
    %51 = arith.index_cast %c2_i32 : i32 to index
    %52 = memref.load %arg3[%51] : memref<15xf32, #tpu.memory_space<smem>>
    %53 = vector.broadcast %52 : f32 to vector<8x128xf32>
    %54 = arith.mulf %53, %50 : vector<8x128xf32>
    %55 = arith.addf %38, %54 : vector<8x128xf32>
    %c3_i32 = arith.constant 3 : i32
    %56 = arith.index_cast %c3_i32 : i32 to index
    %57 = memref.load %arg1[%56] : memref<15xf32, #tpu.memory_space<smem>>
    %58 = vector.broadcast %57 : f32 to vector<8x128xf32>
    %59 = arith.mulf %3, %58 : vector<8x128xf32>
    %60 = arith.index_cast %c3_i32 : i32 to index
    %61 = memref.load %arg2[%60] : memref<15xf32, #tpu.memory_space<smem>>
    %62 = vector.broadcast %61 : f32 to vector<8x128xf32>
    %63 = arith.addf %59, %62 : vector<8x128xf32>
    %64 = arith.mulf %63, %63 : vector<8x128xf32>
    %cst_4 = arith.constant 0.000000e+00 : f32
    %65 = vector.broadcast %cst_4 : f32 to vector<8x128xf32>
    %66 = arith.subf %65, %64 : vector<8x128xf32>
    %67 = math.exp %66 : vector<8x128xf32>
    %68 = arith.index_cast %c3_i32 : i32 to index
    %69 = memref.load %arg3[%68] : memref<15xf32, #tpu.memory_space<smem>>
    %70 = vector.broadcast %69 : f32 to vector<8x128xf32>
    %71 = arith.mulf %70, %67 : vector<8x128xf32>
    %72 = arith.addf %55, %71 : vector<8x128xf32>
    %c4_i32 = arith.constant 4 : i32
    %73 = arith.index_cast %c4_i32 : i32 to index
    %74 = memref.load %arg1[%73] : memref<15xf32, #tpu.memory_space<smem>>
    %75 = vector.broadcast %74 : f32 to vector<8x128xf32>
    %76 = arith.mulf %3, %75 : vector<8x128xf32>
    %77 = arith.index_cast %c4_i32 : i32 to index
    %78 = memref.load %arg2[%77] : memref<15xf32, #tpu.memory_space<smem>>
    %79 = vector.broadcast %78 : f32 to vector<8x128xf32>
    %80 = arith.addf %76, %79 : vector<8x128xf32>
    %81 = arith.mulf %80, %80 : vector<8x128xf32>
    %cst_5 = arith.constant 0.000000e+00 : f32
    %82 = vector.broadcast %cst_5 : f32 to vector<8x128xf32>
    %83 = arith.subf %82, %81 : vector<8x128xf32>
    %84 = math.exp %83 : vector<8x128xf32>
    %85 = arith.index_cast %c4_i32 : i32 to index
    %86 = memref.load %arg3[%85] : memref<15xf32, #tpu.memory_space<smem>>
    %87 = vector.broadcast %86 : f32 to vector<8x128xf32>
    %88 = arith.mulf %87, %84 : vector<8x128xf32>
    %89 = arith.addf %72, %88 : vector<8x128xf32>
    %c5_i32 = arith.constant 5 : i32
    %90 = arith.index_cast %c5_i32 : i32 to index
    %91 = memref.load %arg1[%90] : memref<15xf32, #tpu.memory_space<smem>>
    %92 = vector.broadcast %91 : f32 to vector<8x128xf32>
    %93 = arith.mulf %3, %92 : vector<8x128xf32>
    %94 = arith.index_cast %c5_i32 : i32 to index
    %95 = memref.load %arg2[%94] : memref<15xf32, #tpu.memory_space<smem>>
    %96 = vector.broadcast %95 : f32 to vector<8x128xf32>
    %97 = arith.addf %93, %96 : vector<8x128xf32>
    %98 = arith.mulf %97, %97 : vector<8x128xf32>
    %cst_6 = arith.constant 0.000000e+00 : f32
    %99 = vector.broadcast %cst_6 : f32 to vector<8x128xf32>
    %100 = arith.subf %99, %98 : vector<8x128xf32>
    %101 = math.exp %100 : vector<8x128xf32>
    %102 = arith.index_cast %c5_i32 : i32 to index
    %103 = memref.load %arg3[%102] : memref<15xf32, #tpu.memory_space<smem>>
    %104 = vector.broadcast %103 : f32 to vector<8x128xf32>
    %105 = arith.mulf %104, %101 : vector<8x128xf32>
    %106 = arith.addf %89, %105 : vector<8x128xf32>
    %c6_i32 = arith.constant 6 : i32
    %107 = arith.index_cast %c6_i32 : i32 to index
    %108 = memref.load %arg1[%107] : memref<15xf32, #tpu.memory_space<smem>>
    %109 = vector.broadcast %108 : f32 to vector<8x128xf32>
    %110 = arith.mulf %3, %109 : vector<8x128xf32>
    %111 = arith.index_cast %c6_i32 : i32 to index
    %112 = memref.load %arg2[%111] : memref<15xf32, #tpu.memory_space<smem>>
    %113 = vector.broadcast %112 : f32 to vector<8x128xf32>
    %114 = arith.addf %110, %113 : vector<8x128xf32>
    %115 = arith.mulf %114, %114 : vector<8x128xf32>
    %cst_7 = arith.constant 0.000000e+00 : f32
    %116 = vector.broadcast %cst_7 : f32 to vector<8x128xf32>
    %117 = arith.subf %116, %115 : vector<8x128xf32>
    %118 = math.exp %117 : vector<8x128xf32>
    %119 = arith.index_cast %c6_i32 : i32 to index
    %120 = memref.load %arg3[%119] : memref<15xf32, #tpu.memory_space<smem>>
    %121 = vector.broadcast %120 : f32 to vector<8x128xf32>
    %122 = arith.mulf %121, %118 : vector<8x128xf32>
    %123 = arith.addf %106, %122 : vector<8x128xf32>
    %c7_i32 = arith.constant 7 : i32
    %124 = arith.index_cast %c7_i32 : i32 to index
    %125 = memref.load %arg1[%124] : memref<15xf32, #tpu.memory_space<smem>>
    %126 = vector.broadcast %125 : f32 to vector<8x128xf32>
    %127 = arith.mulf %3, %126 : vector<8x128xf32>
    %128 = arith.index_cast %c7_i32 : i32 to index
    %129 = memref.load %arg2[%128] : memref<15xf32, #tpu.memory_space<smem>>
    %130 = vector.broadcast %129 : f32 to vector<8x128xf32>
    %131 = arith.addf %127, %130 : vector<8x128xf32>
    %132 = arith.mulf %131, %131 : vector<8x128xf32>
    %cst_8 = arith.constant 0.000000e+00 : f32
    %133 = vector.broadcast %cst_8 : f32 to vector<8x128xf32>
    %134 = arith.subf %133, %132 : vector<8x128xf32>
    %135 = math.exp %134 : vector<8x128xf32>
    %136 = arith.index_cast %c7_i32 : i32 to index
    %137 = memref.load %arg3[%136] : memref<15xf32, #tpu.memory_space<smem>>
    %138 = vector.broadcast %137 : f32 to vector<8x128xf32>
    %139 = arith.mulf %138, %135 : vector<8x128xf32>
    %140 = arith.addf %123, %139 : vector<8x128xf32>
    %c8_i32_9 = arith.constant 8 : i32
    %141 = arith.index_cast %c8_i32_9 : i32 to index
    %142 = memref.load %arg1[%141] : memref<15xf32, #tpu.memory_space<smem>>
    %143 = vector.broadcast %142 : f32 to vector<8x128xf32>
    %144 = arith.mulf %3, %143 : vector<8x128xf32>
    %145 = arith.index_cast %c8_i32_9 : i32 to index
    %146 = memref.load %arg2[%145] : memref<15xf32, #tpu.memory_space<smem>>
    %147 = vector.broadcast %146 : f32 to vector<8x128xf32>
    %148 = arith.addf %144, %147 : vector<8x128xf32>
    %149 = arith.mulf %148, %148 : vector<8x128xf32>
    %cst_10 = arith.constant 0.000000e+00 : f32
    %150 = vector.broadcast %cst_10 : f32 to vector<8x128xf32>
    %151 = arith.subf %150, %149 : vector<8x128xf32>
    %152 = math.exp %151 : vector<8x128xf32>
    %153 = arith.index_cast %c8_i32_9 : i32 to index
    %154 = memref.load %arg3[%153] : memref<15xf32, #tpu.memory_space<smem>>
    %155 = vector.broadcast %154 : f32 to vector<8x128xf32>
    %156 = arith.mulf %155, %152 : vector<8x128xf32>
    %157 = arith.addf %140, %156 : vector<8x128xf32>
    %c9_i32 = arith.constant 9 : i32
    %158 = arith.index_cast %c9_i32 : i32 to index
    %159 = memref.load %arg1[%158] : memref<15xf32, #tpu.memory_space<smem>>
    %160 = vector.broadcast %159 : f32 to vector<8x128xf32>
    %161 = arith.mulf %3, %160 : vector<8x128xf32>
    %162 = arith.index_cast %c9_i32 : i32 to index
    %163 = memref.load %arg2[%162] : memref<15xf32, #tpu.memory_space<smem>>
    %164 = vector.broadcast %163 : f32 to vector<8x128xf32>
    %165 = arith.addf %161, %164 : vector<8x128xf32>
    %166 = arith.mulf %165, %165 : vector<8x128xf32>
    %cst_11 = arith.constant 0.000000e+00 : f32
    %167 = vector.broadcast %cst_11 : f32 to vector<8x128xf32>
    %168 = arith.subf %167, %166 : vector<8x128xf32>
    %169 = math.exp %168 : vector<8x128xf32>
    %170 = arith.index_cast %c9_i32 : i32 to index
    %171 = memref.load %arg3[%170] : memref<15xf32, #tpu.memory_space<smem>>
    %172 = vector.broadcast %171 : f32 to vector<8x128xf32>
    %173 = arith.mulf %172, %169 : vector<8x128xf32>
    %174 = arith.addf %157, %173 : vector<8x128xf32>
    %c10_i32 = arith.constant 10 : i32
    %175 = arith.index_cast %c10_i32 : i32 to index
    %176 = memref.load %arg1[%175] : memref<15xf32, #tpu.memory_space<smem>>
    %177 = vector.broadcast %176 : f32 to vector<8x128xf32>
    %178 = arith.mulf %3, %177 : vector<8x128xf32>
    %179 = arith.index_cast %c10_i32 : i32 to index
    %180 = memref.load %arg2[%179] : memref<15xf32, #tpu.memory_space<smem>>
    %181 = vector.broadcast %180 : f32 to vector<8x128xf32>
    %182 = arith.addf %178, %181 : vector<8x128xf32>
    %183 = arith.mulf %182, %182 : vector<8x128xf32>
    %cst_12 = arith.constant 0.000000e+00 : f32
    %184 = vector.broadcast %cst_12 : f32 to vector<8x128xf32>
    %185 = arith.subf %184, %183 : vector<8x128xf32>
    %186 = math.exp %185 : vector<8x128xf32>
    %187 = arith.index_cast %c10_i32 : i32 to index
    %188 = memref.load %arg3[%187] : memref<15xf32, #tpu.memory_space<smem>>
    %189 = vector.broadcast %188 : f32 to vector<8x128xf32>
    %190 = arith.mulf %189, %186 : vector<8x128xf32>
    %191 = arith.addf %174, %190 : vector<8x128xf32>
    %c11_i32 = arith.constant 11 : i32
    %192 = arith.index_cast %c11_i32 : i32 to index
    %193 = memref.load %arg1[%192] : memref<15xf32, #tpu.memory_space<smem>>
    %194 = vector.broadcast %193 : f32 to vector<8x128xf32>
    %195 = arith.mulf %3, %194 : vector<8x128xf32>
    %196 = arith.index_cast %c11_i32 : i32 to index
    %197 = memref.load %arg2[%196] : memref<15xf32, #tpu.memory_space<smem>>
    %198 = vector.broadcast %197 : f32 to vector<8x128xf32>
    %199 = arith.addf %195, %198 : vector<8x128xf32>
    %200 = arith.mulf %199, %199 : vector<8x128xf32>
    %cst_13 = arith.constant 0.000000e+00 : f32
    %201 = vector.broadcast %cst_13 : f32 to vector<8x128xf32>
    %202 = arith.subf %201, %200 : vector<8x128xf32>
    %203 = math.exp %202 : vector<8x128xf32>
    %204 = arith.index_cast %c11_i32 : i32 to index
    %205 = memref.load %arg3[%204] : memref<15xf32, #tpu.memory_space<smem>>
    %206 = vector.broadcast %205 : f32 to vector<8x128xf32>
    %207 = arith.mulf %206, %203 : vector<8x128xf32>
    %208 = arith.addf %191, %207 : vector<8x128xf32>
    %c12_i32 = arith.constant 12 : i32
    %209 = arith.index_cast %c12_i32 : i32 to index
    %210 = memref.load %arg1[%209] : memref<15xf32, #tpu.memory_space<smem>>
    %211 = vector.broadcast %210 : f32 to vector<8x128xf32>
    %212 = arith.mulf %3, %211 : vector<8x128xf32>
    %213 = arith.index_cast %c12_i32 : i32 to index
    %214 = memref.load %arg2[%213] : memref<15xf32, #tpu.memory_space<smem>>
    %215 = vector.broadcast %214 : f32 to vector<8x128xf32>
    %216 = arith.addf %212, %215 : vector<8x128xf32>
    %217 = arith.mulf %216, %216 : vector<8x128xf32>
    %cst_14 = arith.constant 0.000000e+00 : f32
    %218 = vector.broadcast %cst_14 : f32 to vector<8x128xf32>
    %219 = arith.subf %218, %217 : vector<8x128xf32>
    %220 = math.exp %219 : vector<8x128xf32>
    %221 = arith.index_cast %c12_i32 : i32 to index
    %222 = memref.load %arg3[%221] : memref<15xf32, #tpu.memory_space<smem>>
    %223 = vector.broadcast %222 : f32 to vector<8x128xf32>
    %224 = arith.mulf %223, %220 : vector<8x128xf32>
    %225 = arith.addf %208, %224 : vector<8x128xf32>
    %c13_i32 = arith.constant 13 : i32
    %226 = arith.index_cast %c13_i32 : i32 to index
    %227 = memref.load %arg1[%226] : memref<15xf32, #tpu.memory_space<smem>>
    %228 = vector.broadcast %227 : f32 to vector<8x128xf32>
    %229 = arith.mulf %3, %228 : vector<8x128xf32>
    %230 = arith.index_cast %c13_i32 : i32 to index
    %231 = memref.load %arg2[%230] : memref<15xf32, #tpu.memory_space<smem>>
    %232 = vector.broadcast %231 : f32 to vector<8x128xf32>
    %233 = arith.addf %229, %232 : vector<8x128xf32>
    %234 = arith.mulf %233, %233 : vector<8x128xf32>
    %cst_15 = arith.constant 0.000000e+00 : f32
    %235 = vector.broadcast %cst_15 : f32 to vector<8x128xf32>
    %236 = arith.subf %235, %234 : vector<8x128xf32>
    %237 = math.exp %236 : vector<8x128xf32>
    %238 = arith.index_cast %c13_i32 : i32 to index
    %239 = memref.load %arg3[%238] : memref<15xf32, #tpu.memory_space<smem>>
    %240 = vector.broadcast %239 : f32 to vector<8x128xf32>
    %241 = arith.mulf %240, %237 : vector<8x128xf32>
    %242 = arith.addf %225, %241 : vector<8x128xf32>
    %c14_i32 = arith.constant 14 : i32
    %243 = arith.index_cast %c14_i32 : i32 to index
    %244 = memref.load %arg1[%243] : memref<15xf32, #tpu.memory_space<smem>>
    %245 = vector.broadcast %244 : f32 to vector<8x128xf32>
    %246 = arith.mulf %3, %245 : vector<8x128xf32>
    %247 = arith.index_cast %c14_i32 : i32 to index
    %248 = memref.load %arg2[%247] : memref<15xf32, #tpu.memory_space<smem>>
    %249 = vector.broadcast %248 : f32 to vector<8x128xf32>
    %250 = arith.addf %246, %249 : vector<8x128xf32>
    %251 = arith.mulf %250, %250 : vector<8x128xf32>
    %cst_16 = arith.constant 0.000000e+00 : f32
    %252 = vector.broadcast %cst_16 : f32 to vector<8x128xf32>
    %253 = arith.subf %252, %251 : vector<8x128xf32>
    %254 = math.exp %253 : vector<8x128xf32>
    %255 = arith.index_cast %c14_i32 : i32 to index
    %256 = memref.load %arg3[%255] : memref<15xf32, #tpu.memory_space<smem>>
    %257 = vector.broadcast %256 : f32 to vector<8x128xf32>
    %258 = arith.mulf %257, %254 : vector<8x128xf32>
    %259 = arith.addf %242, %258 : vector<8x128xf32>
    %c15_i32 = arith.constant 15 : i32
    %260 = arith.index_cast %1 : i32 to index
    %c0_17 = arith.constant 0 : index
    %261 = vector.load %arg5[%260, %c0_17] : memref<8x128xf32, #tpu.memory_space<vmem>>, vector<8x128xf32>
    tpu.vector_store %arg5[%260, %c0_17], %259 {strides = array<i32>} : memref<8x128xf32, #tpu.memory_space<vmem>>, vector<8x128xf32>,
    %c1_i32_18 = arith.constant 1 : i32
    return
  }
  func.func @transform_0(%arg0: i32) -> i32 {
    %c0_i32 = arith.constant 0 : i32
    %c0_i32_0 = arith.constant 0 : i32
    return %c0_i32 : i32
  }
  func.func @transform_1(%arg0: i32) -> i32 {
    %c0_i32 = arith.constant 0 : i32
    %c0_i32_0 = arith.constant 0 : i32
    return %c0_i32 : i32
  }
  func.func @transform_2(%arg0: i32) -> i32 {
    %c0_i32 = arith.constant 0 : i32
    %c0_i32_0 = arith.constant 0 : i32
    return %c0_i32 : i32
  }
  func.func @transform_3(%arg0: i32) -> (i32, i32) {
    %c0_i32 = arith.constant 0 : i32
    %c0_i32_0 = arith.constant 0 : i32
    return %arg0, %c0_i32 : i32, i32
  }
  func.func @transform_4(%arg0: i32) -> (i32, i32) {
    %c0_i32 = arith.constant 0 : i32
    %c0_i32_0 = arith.constant 0 : i32
    return %arg0, %c0_i32 : i32, i32
  }
}

</mosaic_0001>

<llo_original>
// kernel: tpu_custom_call.1
$region0: #{tpu_custom_call.1}
  #allocation0 [shape = 'u32[]', space=smem, size = 0x4, offset = 0x4, fixed_abs, tag = 'smem constant byte address 0x4 - core index']
  #allocation1 [shape = 'u32[144,128]{1,0:T(1,128)}', space=vmem, size = 0x12000, scoped, tag = 'internal scratch']
  %s0 = inlined_call_operand.hbm [shape: f32[15], index: 0, kind: input, shape index: {}]
  %s1 = inlined_call_operand.vmem [shape: f32[15], index: 1, kind: input, shape index: {}]
  %s2 = inlined_call_operand.vmem [shape: f32[15], index: 2, kind: input, shape index: {}]
  %s3 = inlined_call_operand.vmem [shape: f32[8,128], index: 3, kind: input, shape index: {}]
  %s4 = inlined_call_operand.hbm [shape: f32[8,128], index: 4, kind: output, shape index: {}]
  %s5 = sld [smem:[#allocation0]]
  $region38: #{tpu_custom_call.1} parent=0
    _
  %s7 = ssub.s32 1, %s5
  %s8 = scalar_select 0, %s7, %s5
  $region1: #{tpu_custom_call.1} parent=0
    #allocation2 [shape = 'u8[512]{0}', space=smem, size = 0x200, scoped, tag = 'input window, operand 0, single buffered']
    #allocation3 [shape = 's32[1]{0}', space=sflag, size = 0x4, scoped, tag = 'scoped memory for tpu_custom_call.1']
    #allocation4 [shape = 's32[1]{0}', space=sflag, size = 0x4, scoped, tag = 'scoped memory for tpu_custom_call.1']
    #allocation5 [shape = 's32[1]{0}', space=sflag, size = 0x4, scoped, tag = 'scoped memory for tpu_custom_call.1']
    #allocation6 [shape = 'u8[512]{0}', space=smem, size = 0x200, scoped, tag = 'input window, operand 1, single buffered']
    #allocation7 [shape = 'u8[512]{0}', space=smem, size = 0x200, scoped, tag = 'input window, operand 2, single buffered']
    #allocation8 [shape = 's32[1]{0}', space=sflag, size = 0x4, scoped, tag = 'scoped memory for tpu_custom_call.1']
    #allocation9 [shape = 'u8[4096]{0}', space=vmem, size = 0x1000, scoped, tag = 'output window, operand 0, single buffered']
    %9 = vsyncpa [#allocation4], 0
    %10 = vsyncpa [#allocation5], 0
    %11 = vsyncpa [#allocation8], 0
    %12 = vsyncpa [#allocation3], 0
    // Predicated region
    $region2: #{tpu_custom_call.1} parent=1 // pred_check
      _
    $region3: #{tpu_custom_call.1} parent=1 // pred_check_branch
      %14 = sbr.rel (0) target = $region5
    $region4: #{tpu_custom_call.1} parent=1 // pred_region
      %s16 = ssub.s32 16, 16
      %17 = vsyncadd [#allocation4], %s16
      %20 = dma.hbm_to_smem %s0, 16, [#allocation2], [#allocation4]
    $region5: #{tpu_custom_call.1} parent=1 // pred_fallthru
      _
    // Predicated region
    $region6: #{tpu_custom_call.1} parent=1 // pred_check
      _
    $region7: #{tpu_custom_call.1} parent=1 // pred_check_branch
      %22 = sbr.rel (0) target = $region9
    $region8: #{tpu_custom_call.1} parent=1 // pred_region
      %s24 = ssub.s32 16, 16
      %25 = vsyncadd [#allocation5], %s24
      %s27 = sshll.u32 %s1, 4
      %s28 = int_to_ptr.vmem [resolvable:$true] %s27
      %30 = dma.vmem_to_smem %s28, 16, [#allocation6], [#allocation5]
    $region9: #{tpu_custom_call.1} parent=1 // pred_fallthru
      _
    // Predicated region
    $region10: #{tpu_custom_call.1} parent=1 // pred_check
      _
    $region11: #{tpu_custom_call.1} parent=1 // pred_check_branch
      %32 = sbr.rel (0) target = $region13
    $region12: #{tpu_custom_call.1} parent=1 // pred_region
      %s34 = ssub.s32 16, 16
      %35 = vsyncadd [#allocation8], %s34
      %s37 = sshll.u32 %s2, 4
      %s38 = int_to_ptr.vmem [resolvable:$true] %s37
      %40 = dma.vmem_to_smem %s38, 16, [#allocation7], [#allocation8]
    $region13: #{tpu_custom_call.1} parent=1 // pred_fallthru
      _
    // Predicated region
    $region14: #{tpu_custom_call.1} parent=1 // pred_check
      _
    $region15: #{tpu_custom_call.1} parent=1 // pred_check_branch
      %42 = sbr.rel (0) target = $region17
    $region16: #{tpu_custom_call.1} parent=1 // pred_region
      _
    $region17: #{tpu_custom_call.1} parent=1 // pred_fallthru
      _
    // Predicated region
    $region18: #{tpu_custom_call.1} parent=1 // pred_check
      _
    $region19: #{tpu_custom_call.1} parent=1 // pred_check_branch
      %44 = sbr.rel (0) target = $region21
    $region20: #{tpu_custom_call.1} parent=1 // pred_region
      %45 = dma.done [#allocation4], 16
    $region21: #{tpu_custom_call.1} parent=1 // pred_fallthru
      _
    // Predicated region
    $region22: #{tpu_custom_call.1} parent=1 // pred_check
      _
    $region23: #{tpu_custom_call.1} parent=1 // pred_check_branch
      %47 = sbr.rel (0) target = $region25
    $region24: #{tpu_custom_call.1} parent=1 // pred_region
      %48 = dma.done [#allocation5], 16
    $region25: #{tpu_custom_call.1} parent=1 // pred_fallthru
      _
    // Predicated region
    $region26: #{tpu_custom_call.1} parent=1 // pred_check
      _
    $region27: #{tpu_custom_call.1} parent=1 // pred_check_branch
      %50 = sbr.rel (0) target = $region29
    $region28: #{tpu_custom_call.1} parent=1 // pred_region
      %51 = dma.done [#allocation8], 16
    $region29: #{tpu_custom_call.1} parent=1 // pred_fallthru
      _
    %52 = sfence
    %v53 = vld [vmem:[%s3] sm:$0xff]
    %s54 = sld [smem:[#allocation2]]
    %v55 = vstv %s54
    %v56 = vmul.f32 %v53, %v55
    %s57 = sld [smem:[#allocation6]]
    %v58 = vstv %s57
    %v59 = vadd.f32 %v56, %v58
    %v60 = vmul.f32 %v59, %v59
    %v61 = vsub.f32 0.0, %v60
    %v62 = vmul.f32 %v61, 1.442695
    %v63 = vpow.pop %v62
    %s64 = sld [smem:[#allocation7]]
    %v65 = vstv %s64
    %v66 = vmul.f32 %v65, %v63
    %v67 = vadd.f32 %v66, 0.0
    %s68 = sld [smem:[#allocation2 + $0x1]]
    %v69 = vstv %s68
    %v70 = vmul.f32 %v53, %v69
    %s71 = sld [smem:[#allocation6 + $0x1]]
    %v72 = vstv %s71
    %v73 = vadd.f32 %v70, %v72
    %v74 = vmul.f32 %v73, %v73
    %v75 = vsub.f32 0.0, %v74
    %v76 = vmul.f32 %v75, 1.442695
    %v77 = vpow.pop %v76
    %s78 = sld [smem:[#allocation7 + $0x1]]
    %v79 = vstv %s78
    %v80 = vmul.f32 %v79, %v77
    %v81 = vadd.f32 %v67, %v80
    %s82 = sld [smem:[#allocation2 + $0x2]]
    %v83 = vstv %s82
    %v84 = vmul.f32 %v53, %v83
    %s85 = sld [smem:[#allocation6 + $0x2]]
    %v86 = vstv %s85
    %v87 = vadd.f32 %v84, %v86
    %v88 = vmul.f32 %v87, %v87
    %v89 = vsub.f32 0.0, %v88
    %v90 = vmul.f32 %v89, 1.442695
    %v91 = vpow.pop %v90
    %s92 = sld [smem:[#allocation7 + $0x2]]
    %v93 = vstv %s92
    %v94 = vmul.f32 %v93, %v91
    %v95 = vadd.f32 %v81, %v94
    %s96 = sld [smem:[#allocation2 + $0x3]]
    %v97 = vstv %s96
    %v98 = vmul.f32 %v53, %v97
    %s99 = sld [smem:[#allocation6 + $0x3]]
    %v100 = vstv %s99
    %v101 = vadd.f32 %v98, %v100
    %v102 = vmul.f32 %v101, %v101
    %v103 = vsub.f32 0.0, %v102
    %v104 = vmul.f32 %v103, 1.442695
    %v105 = vpow.pop %v104
    %s106 = sld [smem:[#allocation7 + $0x3]]
    %v107 = vstv %s106
    %v108 = vmul.f32 %v107, %v105
    %v109 = vadd.f32 %v95, %v108
    %s110 = sld [smem:[#allocation2 + $0x4]]
    %v111 = vstv %s110
    %v112 = vmul.f32 %v53, %v111
    %s113 = sld [smem:[#allocation6 + $0x4]]
    %v114 = vstv %s113
    %v115 = vadd.f32 %v112, %v114
    %v116 = vmul.f32 %v115, %v115
    %v117 = vsub.f32 0.0, %v116
    %v118 = vmul.f32 %v117, 1.442695
    %v119 = vpow.pop %v118
    %s120 = sld [smem:[#allocation7 + $0x4]]
    %v121 = vstv %s120
    %v122 = vmul.f32 %v121, %v119
    %v123 = vadd.f32 %v109, %v122
    %s124 = sld [smem:[#allocation2 + $0x5]]
    %v125 = vstv %s124
    %v126 = vmul.f32 %v53, %v125
    %s127 = sld [smem:[#allocation6 + $0x5]]
    %v128 = vstv %s127
    %v129 = vadd.f32 %v126, %v128
    %v130 = vmul.f32 %v129, %v129
    %v131 = vsub.f32 0.0, %v130
    %v132 = vmul.f32 %v131, 1.442695
    %v133 = vpow.pop %v132
    %s134 = sld [smem:[#allocation7 + $0x5]]
    %v135 = vstv %s134
    %v136 = vmul.f32 %v135, %v133
    %v137 = vadd.f32 %v123, %v136
    %s138 = sld [smem:[#allocation2 + $0x6]]
    %v139 = vstv %s138
    %v140 = vmul.f32 %v53, %v139
    %s141 = sld [smem:[#allocation6 + $0x6]]
    %v142 = vstv %s141
    %v143 = vadd.f32 %v140, %v142
    %v144 = vmul.f32 %v143, %v143
    %v145 = vsub.f32 0.0, %v144
    %v146 = vmul.f32 %v145, 1.442695
    %v147 = vpow.pop %v146
    %s148 = sld [smem:[#allocation7 + $0x6]]
    %v149 = vstv %s148
    %v150 = vmul.f32 %v149, %v147
    %v151 = vadd.f32 %v137, %v150
    %s152 = sld [smem:[#allocation2 + $0x7]]
    %v153 = vstv %s152
    %v154 = vmul.f32 %v53, %v153
    %s155 = sld [smem:[#allocation6 + $0x7]]
    %v156 = vstv %s155
    %v157 = vadd.f32 %v154, %v156
    %v158 = vmul.f32 %v157, %v157
    %v159 = vsub.f32 0.0, %v158
    %v160 = vmul.f32 %v159, 1.442695
    %v161 = vpow.pop %v160
    %s162 = sld [smem:[#allocation7 + $0x7]]
    %v163 = vstv %s162
    %v164 = vmul.f32 %v163, %v161
    %v165 = vadd.f32 %v151, %v164
    %s166 = sld [smem:[#allocation2 + $0x8]]
    %v167 = vstv %s166
    %v168 = vmul.f32 %v53, %v167
    %s169 = sld [smem:[#allocation6 + $0x8]]
    %v170 = vstv %s169
    %v171 = vadd.f32 %v168, %v170
    %v172 = vmul.f32 %v171, %v171
    %v173 = vsub.f32 0.0, %v172
    %v174 = vmul.f32 %v173, 1.442695
    %v175 = vpow.pop %v174
    %s176 = sld [smem:[#allocation7 + $0x8]]
    %v177 = vstv %s176
    %v178 = vmul.f32 %v177, %v175
    %v179 = vadd.f32 %v165, %v178
    %s180 = sld [smem:[#allocation2 + $0x9]]
    %v181 = vstv %s180
    %v182 = vmul.f32 %v53, %v181
    %s183 = sld [smem:[#allocation6 + $0x9]]
    %v184 = vstv %s183
    %v185 = vadd.f32 %v182, %v184
    %v186 = vmul.f32 %v185, %v185
    %v187 = vsub.f32 0.0, %v186
    %v188 = vmul.f32 %v187, 1.442695
    %v189 = vpow.pop %v188
    %s190 = sld [smem:[#allocation7 + $0x9]]
    %v191 = vstv %s190
    %v192 = vmul.f32 %v191, %v189
    %v193 = vadd.f32 %v179, %v192
    %s194 = sld [smem:[#allocation2 + $0xa]]
    %v195 = vstv %s194
    %v196 = vmul.f32 %v53, %v195
    %s197 = sld [smem:[#allocation6 + $0xa]]
    %v198 = vstv %s197
    %v199 = vadd.f32 %v196, %v198
    %v200 = vmul.f32 %v199, %v199
    %v201 = vsub.f32 0.0, %v200
    %v202 = vmul.f32 %v201, 1.442695
    %v203 = vpow.pop %v202
    %s204 = sld [smem:[#allocation7 + $0xa]]
    %v205 = vstv %s204
    %v206 = vmul.f32 %v205, %v203
    %v207 = vadd.f32 %v193, %v206
    %s208 = sld [smem:[#allocation2 + $0xb]]
    %v209 = vstv %s208
    %v210 = vmul.f32 %v53, %v209
    %s211 = sld [smem:[#allocation6 + $0xb]]
    %v212 = vstv %s211
    %v213 = vadd.f32 %v210, %v212
    %v214 = vmul.f32 %v213, %v213
    %v215 = vsub.f32 0.0, %v214
    %v216 = vmul.f32 %v215, 1.442695
    %v217 = vpow.pop %v216
    %s218 = sld [smem:[#allocation7 + $0xb]]
    %v219 = vstv %s218
    %v220 = vmul.f32 %v219, %v217
    %v221 = vadd.f32 %v207, %v220
    %s222 = sld [smem:[#allocation2 + $0xc]]
    %v223 = vstv %s222
    %v224 = vmul.f32 %v53, %v223
    %s225 = sld [smem:[#allocation6 + $0xc]]
    %v226 = vstv %s225
    %v227 = vadd.f32 %v224, %v226
    %v228 = vmul.f32 %v227, %v227
    %v229 = vsub.f32 0.0, %v228
    %v230 = vmul.f32 %v229, 1.442695
    %v231 = vpow.pop %v230
    %s232 = sld [smem:[#allocation7 + $0xc]]
    %v233 = vstv %s232
    %v234 = vmul.f32 %v233, %v231
    %v235 = vadd.f32 %v221, %v234
    %s236 = sld [smem:[#allocation2 + $0xd]]
    %v237 = vstv %s236
    %v238 = vmul.f32 %v53, %v237
    %s239 = sld [smem:[#allocation6 + $0xd]]
    %v240 = vstv %s239
    %v241 = vadd.f32 %v238, %v240
    %v242 = vmul.f32 %v241, %v241
    %v243 = vsub.f32 0.0, %v242
    %v244 = vmul.f32 %v243, 1.442695
    %v245 = vpow.pop %v244
    %s246 = sld [smem:[#allocation7 + $0xd]]
    %v247 = vstv %s246
    %v248 = vmul.f32 %v247, %v245
    %v249 = vadd.f32 %v235, %v248
    %s250 = sld [smem:[#allocation2 + $0xe]]
    %v251 = vstv %s250
    %v252 = vmul.f32 %v53, %v251
    %s253 = sld [smem:[#allocation6 + $0xe]]
    %v254 = vstv %s253
    %v255 = vadd.f32 %v252, %v254
    %v256 = vmul.f32 %v255, %v255
    %v257 = vsub.f32 0.0, %v256
    %v258 = vmul.f32 %v257, 1.442695
    %v259 = vpow.pop %v258
    %s260 = sld [smem:[#allocation7 + $0xe]]
    %v261 = vstv %s260
    %v262 = vmul.f32 %v261, %v259
    %v263 = vadd.f32 %v249, %v262
    %264 = vst [vmem:[#allocation9] sm:$0xff] %v263
    // Predicated region
    $region30: #{tpu_custom_call.1} parent=1 // pred_check
      _
    $region31: #{tpu_custom_call.1} parent=1 // pred_check_branch
      %266 = sbr.rel (0) target = $region33
    $region32: #{tpu_custom_call.1} parent=1 // pred_region
      %s268 = ssub.s32 128, 128
      %269 = vsyncadd [#allocation3], %s268
      %s271 = sshll.u32 [#allocation9], 4
      %s272 = int_to_ptr.vmem [resolvable:$true] %s271
      %274 = dma.vmem_to_hbm [thread:$0]  %s272, 128, %s4, [#allocation3]
    $region33: #{tpu_custom_call.1} parent=1 // pred_fallthru
      _
    // Predicated region
    $region34: #{tpu_custom_call.1} parent=1 // pred_check
      _
    $region35: #{tpu_custom_call.1} parent=1 // pred_check_branch
      %276 = sbr.rel (0) target = $region37
    $region36: #{tpu_custom_call.1} parent=1 // pred_region
      %277 = dma.done [#allocation3], 128
    $region37: #{tpu_custom_call.1} parent=1 // pred_fallthru
      _
    %278 = vsyncpa [#allocation3], 1
    %279 = vsyncpa [#allocation4], 1
    %280 = vsyncpa [#allocation5], 1
    %281 = vsyncpa [#allocation8], 1

</llo_original>
